<compile_context>
chip_gen: v5e
topology: v5e:2x2
jax: 0.10.0
libtpu: 0.0.40
codegen_flags: <defaults>
</compile_context>

<pallas_src>
import jax
import jax.numpy as jnp
from jax.experimental import pallas as pl
from jax.experimental.pallas import tpu as pltpu


# ------------------------- Fused LSTM + FC kernel ----------------------------
def lstm_fused_kernel(ids_ref, emb_ref, wih_ref, whh_ref, b_ref,
                      wfc_ref, bfc_ref, out_ref):
    # ids_ref : (T*B, 1) int32  time-major flattened token ids
    # emb_ref : (V, E)          embedding table
    # wih_ref : (E, 4H)   whh_ref: (H, 4H)   b_ref: (1, 4H)  (= b_ih + b_hh)
    # wfc_ref : (T*H, C)  bfc_ref: (1, C)
    # out_ref : (B, C)          log-probabilities
    B, C = out_ref.shape
    V = emb_ref.shape[0]
    H = whh_ref.shape[0]
    TB = ids_ref.shape[0]
    T = TB // B

    # --- Embedding: one-hot @ table on the MXU (no XLA gather, no HBM hop). ---
    ids = ids_ref[...]                                              # (T*B, 1)
    vocab_iota = jax.lax.broadcasted_iota(jnp.int32, (TB, V), 1)    # (T*B, V)
    one_hot = (ids == vocab_iota).astype(jnp.float32)
    x = jnp.dot(one_hot, emb_ref[...],
                preferred_element_type=jnp.float32)                 # (T*B, E)

    # --- Hoisted input projection: all timesteps in one matmul. ---
    gates_x = (
        jnp.dot(x, wih_ref[...], preferred_element_type=jnp.float32)
        + b_ref[...]
    )  # (T*B, 4H)

    w_hh = whh_ref[...]  # loop-invariant, load once

    # Per-lane mask selecting the "g" (cell-candidate) gate -> tanh; others sigmoid.
    lane = jax.lax.broadcasted_iota(jnp.int32, (B, 4 * H), 1)
    g_mask = (lane >= 2 * H) & (lane < 3 * H)

    h = jnp.zeros((B, H), jnp.float32)
    c = jnp.zeros((B, H), jnp.float32)
    hs = []
    # Tiny fixed trip count: unroll at trace time; h/c stay in vregs and every
    # slice offset is static.
    for t in range(T):
        gates = gates_x[t * B:(t + 1) * B, :] + jnp.dot(
            h, w_hh, preferred_element_type=jnp.float32
        )  # (B, 4H)
        # One activation pass over the packed 4H-lane gate vector.
        acts = jnp.where(g_mask, jnp.tanh(gates), jax.nn.sigmoid(gates))
        i = acts[:, 0 * H:1 * H]
        f = acts[:, 1 * H:2 * H]
        g = acts[:, 2 * H:3 * H]
        o = acts[:, 3 * H:4 * H]
        c = f * c + i * g
        h = o * jnp.tanh(c)
        hs.append(h)

    # (B, T*H): exactly PyTorch's output.reshape(-1, T*H) for batch_first LSTM.
    h_flat = jnp.concatenate(hs, axis=1)

    # --- Fused FC + log_softmax, single output store. ---
    logits = (
        jnp.dot(h_flat, wfc_ref[...], preferred_element_type=jnp.float32)
        + bfc_ref[...]
    )  # (B, C)
    m = jnp.max(logits, axis=-1, keepdims=True)
    z = logits - m
    lse = jnp.log(jnp.sum(jnp.exp(z), axis=-1, keepdims=True))
    out_ref[...] = z - lse


def run_fused_lstm(ids_tm, emb, w_ih, w_hh, b_lstm, w_fc, b_fc, batch):
    """ids_tm: (T*B, 1) int32 time-major flattened ids -> (B, C) log-probs."""
    C = w_fc.shape[1]
    vmem = pl.BlockSpec(memory_space=pltpu.MemorySpace.VMEM)
    return pl.pallas_call(
        lstm_fused_kernel,
        out_shape=jax.ShapeDtypeStruct((batch, C), jnp.float32),
        in_specs=[vmem] * 7,
        out_specs=vmem,
    )(ids_tm, emb, w_ih, w_hh, b_lstm, w_fc, b_fc)


# ------------------------------- Model ---------------------------------------
def lstm_model_forward(token_ids, params):
    """token_ids: (B, T) int32 -> (B, num_of_tags) log-probs."""
    B, T = token_ids.shape
    # Time-major flatten of the ids (64 bytes of int32); rows for step t are
    # the contiguous block [t*B:(t+1)*B] inside the kernel.
    ids_tm = jnp.transpose(token_ids, (1, 0)).reshape(T * B, 1).astype(jnp.int32)
    return run_fused_lstm(
        ids_tm,
        params["embedding"].astype(jnp.float32),
        params["w_ih"], params["w_hh"], params["b_lstm"],
        params["w_fc"], params["b_fc"],
        batch=B,
    )


# --------------------------- Pure-JAX reference ------------------------------
def reference_forward(token_ids, params):
    emb = params["embedding"]
    x = jnp.take(emb, token_ids, axis=0).astype(jnp.float32)   # (B, T, E)
    B, T, _ = x.shape
    H = params["w_hh"].shape[0]

    def step(carry, x_t):
        h, c = carry
        gates = x_t @ params["w_ih"] + h @ params["w_hh"] + params["b_lstm"][0]
        i = jax.nn.sigmoid(gates[:, 0 * H:1 * H])
        f = jax.nn.sigmoid(gates[:, 1 * H:2 * H])
        g = jnp.tanh(gates[:, 2 * H:3 * H])
        o = jax.nn.sigmoid(gates[:, 3 * H:4 * H])
        c = f * c + i * g
        h = o * jnp.tanh(c)
        return (h, c), h

    h0 = jnp.zeros((B, H), jnp.float32)
    (_, _), hs = jax.lax.scan(step, (h0, h0), jnp.transpose(x, (1, 0, 2)))
    h_flat = jnp.transpose(hs, (1, 0, 2)).reshape(B, -1)
    logits = h_flat @ params["w_fc"] + params["b_fc"][0]
    return jax.nn.log_softmax(logits, axis=1)


# --------------------------------- Main ---------------------------------------
if __name__ == "__main__":
    # Small, TPU-friendly hyperparameters consistent with the PyTorch module.
    VOCAB = 50
    EMB = 32          # embedding_dim
    HID = 32          # lstm_hidden_dim
    SEQ = 8           # seq_max_length
    TAGS = 8          # num_of_tags
    BATCH = 2

    key = jax.random.PRNGKey(0)
    ks = jax.random.split(key, 8)

    params = {
        "embedding": jax.random.normal(ks[0], (VOCAB, EMB), jnp.float32) * 0.1,
        # Stored pre-transposed relative to PyTorch: x @ W_ih, h @ W_hh.
        "w_ih": jax.random.normal(ks[1], (EMB, 4 * HID), jnp.float32) * 0.1,
        "w_hh": jax.random.normal(ks[2], (HID, 4 * HID), jnp.float32) * 0.1,
        # Combined b_ih + b_hh, kept 2D (1, 4H) for clean broadcasting in-kernel.
        "b_lstm": jax.random.normal(ks[3], (1, 4 * HID), jnp.float32) * 0.1,
        "w_fc": jax.random.normal(ks[4], (SEQ * HID, TAGS), jnp.float32) * 0.1,
        "b_fc": jax.random.normal(ks[5], (1, TAGS), jnp.float32) * 0.1,
    }

    token_ids = jax.random.randint(ks[6], (BATCH, SEQ), 0, VOCAB, dtype=jnp.int32)

    out = lstm_model_forward(token_ids, params)
    out = jax.block_until_ready(out)

    ref = jax.block_until_ready(reference_forward(token_ids, params))
    assert out.shape == (BATCH, TAGS)
    # Tolerance covers MXU-vs-XLA f32 matmul precision-path differences.
    assert jnp.allclose(out, ref, atol=1e-3, rtol=1e-3), "mismatch vs reference"

    print("KERNEL_OK")
</pallas_src>

<mosaic_0001>
module attributes {stable_mosaic.version = 11 : i64} {
  func.func @lstm_fused_kernel(%arg0: memref<16x1xi32, #tpu.memory_space<vmem>>, %arg1: memref<50x32xf32, #tpu.memory_space<vmem>>, %arg2: memref<32x128xf32, #tpu.memory_space<vmem>>, %arg3: memref<32x128xf32, #tpu.memory_space<vmem>>, %arg4: memref<1x128xf32, #tpu.memory_space<vmem>>, %arg5: memref<256x8xf32, #tpu.memory_space<vmem>>, %arg6: memref<1x8xf32, #tpu.memory_space<vmem>>, %arg7: memref<2x8xf32, #tpu.memory_space<vmem>>) attributes {dimension_semantics = [], scalar_prefetch = 0 : i64, scratch_operands = 0 : i64, tpu.core_type = #tpu.core_type<tc>} {
    %c0 = arith.constant 0 : index
    %c0_0 = arith.constant 0 : index
    %0 = vector.load %arg0[%c0, %c0_0] : memref<16x1xi32, #tpu.memory_space<vmem>>, vector<16x1xi32>
    %1 = tpu.iota {dimensions = array<i32: 1>} : vector<16x50xi32>
    %2 = vector.broadcast %0 : vector<16x1xi32> to vector<16x50xi32>
    %3 = arith.cmpi eq, %2, %1 : vector<16x50xi32>
    %4 = arith.extui %3 : vector<16x50xi1> to vector<16x50xi32>
    %5 = arith.sitofp %4 : vector<16x50xi32> to vector<16x50xf32>
    %c0_1 = arith.constant 0 : index
    %c0_2 = arith.constant 0 : index
    %6 = vector.load %arg1[%c0_1, %c0_2] : memref<50x32xf32, #tpu.memory_space<vmem>>, vector<50x32xf32>
    %cst = arith.constant dense<0.000000e+00> : vector<16x32xf32>
    %7 = tpu.matmul %5, %6, %cst {dimension_numbers = #tpu.dot_dimension_numbers<[1], [0], [0], [1], [0, 0, 1, 1], [], []>} : vector<16x50xf32>, vector<50x32xf32>, vector<16x32xf32> -> vector<16x32xf32>
    %c0_3 = arith.constant 0 : index
    %c0_4 = arith.constant 0 : index
    %8 = vector.load %arg2[%c0_3, %c0_4] : memref<32x128xf32, #tpu.memory_space<vmem>>, vector<32x128xf32>
    %cst_5 = arith.constant dense<0.000000e+00> : vector<16x128xf32>
    %9 = tpu.matmul %7, %8, %cst_5 {dimension_numbers = #tpu.dot_dimension_numbers<[1], [0], [0], [1], [0, 0, 1, 1], [], []>} : vector<16x32xf32>, vector<32x128xf32>, vector<16x128xf32> -> vector<16x128xf32>
    %c0_6 = arith.constant 0 : index
    %c0_7 = arith.constant 0 : index
    %10 = vector.load %arg4[%c0_6, %c0_7] : memref<1x128xf32, #tpu.memory_space<vmem>>, vector<1x128xf32>
    %11 = vector.broadcast %10 : vector<1x128xf32> to vector<16x128xf32>
    %12 = arith.addf %9, %11 : vector<16x128xf32>
    %c0_8 = arith.constant 0 : index
    %c0_9 = arith.constant 0 : index
    %13 = vector.load %arg3[%c0_8, %c0_9] : memref<32x128xf32, #tpu.memory_space<vmem>>, vector<32x128xf32>
    %14 = tpu.iota {dimensions = array<i32: 1>} : vector<2x128xi32>
    %c64_i32 = arith.constant 64 : i32
    %15 = vector.broadcast %c64_i32 : i32 to vector<2x128xi32>
    %16 = arith.cmpi sge, %14, %15 : vector<2x128xi32>
    %c96_i32 = arith.constant 96 : i32
    %17 = vector.broadcast %c96_i32 : i32 to vector<2x128xi32>
    %18 = arith.cmpi slt, %14, %17 : vector<2x128xi32>
    %19 = arith.andi %16, %18 : vector<2x128xi1>
    %cst_10 = arith.constant 0.000000e+00 : f32
    %20 = vector.broadcast %cst_10 : f32 to vector<2x32xf32>
    %cst_11 = arith.constant 0.000000e+00 : f32
    %21 = vector.broadcast %cst_11 : f32 to vector<2x32xf32>
    %22 = vector.extract_strided_slice %12 {offsets = [0, 0], sizes = [2, 128], strides = [1, 1]} : vector<16x128xf32> to vector<2x128xf32>
    %cst_12 = arith.constant dense<0.000000e+00> : vector<2x128xf32>
    %23 = tpu.matmul %20, %13, %cst_12 {dimension_numbers = #tpu.dot_dimension_numbers<[1], [0], [0], [1], [0, 0, 1, 1], [], []>} : vector<2x32xf32>, vector<32x128xf32>, vector<2x128xf32> -> vector<2x128xf32>
    %24 = arith.addf %22, %23 : vector<2x128xf32>
    %25 = math.tanh %24 : vector<2x128xf32>
    %26 = arith.negf %24 : vector<2x128xf32>
    %27 = math.exp %26 : vector<2x128xf32>
    %cst_13 = arith.constant 1.000000e+00 : f32
    %28 = vector.broadcast %cst_13 : f32 to vector<2x128xf32>
    %29 = arith.addf %28, %27 : vector<2x128xf32>
    %30 = arith.divf %28, %29 : vector<2x128xf32>
    %31 = arith.select %19, %25, %30 : vector<2x128xi1>, vector<2x128xf32>
    %32 = vector.extract_strided_slice %31 {offsets = [0, 0], sizes = [2, 32], strides = [1, 1]} : vector<2x128xf32> to vector<2x32xf32>
    %33 = vector.extract_strided_slice %31 {offsets = [0, 32], sizes = [2, 32], strides = [1, 1]} : vector<2x128xf32> to vector<2x32xf32>
    %34 = vector.extract_strided_slice %31 {offsets = [0, 64], sizes = [2, 32], strides = [1, 1]} : vector<2x128xf32> to vector<2x32xf32>
    %35 = vector.extract_strided_slice %31 {offsets = [0, 96], sizes = [2, 32], strides = [1, 1]} : vector<2x128xf32> to vector<2x32xf32>
    %36 = arith.mulf %33, %21 : vector<2x32xf32>
    %37 = arith.mulf %32, %34 : vector<2x32xf32>
    %38 = arith.addf %36, %37 : vector<2x32xf32>
    %39 = math.tanh %38 : vector<2x32xf32>
    %40 = arith.mulf %35, %39 : vector<2x32xf32>
    %41 = vector.extract_strided_slice %12 {offsets = [2, 0], sizes = [2, 128], strides = [1, 1]} : vector<16x128xf32> to vector<2x128xf32>
    %cst_14 = arith.constant dense<0.000000e+00> : vector<2x128xf32>
    %42 = tpu.matmul %40, %13, %cst_14 {dimension_numbers = #tpu.dot_dimension_numbers<[1], [0], [0], [1], [0, 0, 1, 1], [], []>} : vector<2x32xf32>, vector<32x128xf32>, vector<2x128xf32> -> vector<2x128xf32>
    %43 = arith.addf %41, %42 : vector<2x128xf32>
    %44 = math.tanh %43 : vector<2x128xf32>
    %45 = arith.negf %43 : vector<2x128xf32>
    %46 = math.exp %45 : vector<2x128xf32>
    %cst_15 = arith.constant 1.000000e+00 : f32
    %47 = vector.broadcast %cst_15 : f32 to vector<2x128xf32>
    %48 = arith.addf %47, %46 : vector<2x128xf32>
    %49 = arith.divf %47, %48 : vector<2x128xf32>
    %50 = arith.select %19, %44, %49 : vector<2x128xi1>, vector<2x128xf32>
    %51 = vector.extract_strided_slice %50 {offsets = [0, 0], sizes = [2, 32], strides = [1, 1]} : vector<2x128xf32> to vector<2x32xf32>
    %52 = vector.extract_strided_slice %50 {offsets = [0, 32], sizes = [2, 32], strides = [1, 1]} : vector<2x128xf32> to vector<2x32xf32>
    %53 = vector.extract_strided_slice %50 {offsets = [0, 64], sizes = [2, 32], strides = [1, 1]} : vector<2x128xf32> to vector<2x32xf32>
    %54 = vector.extract_strided_slice %50 {offsets = [0, 96], sizes = [2, 32], strides = [1, 1]} : vector<2x128xf32> to vector<2x32xf32>
    %55 = arith.mulf %52, %38 : vector<2x32xf32>
    %56 = arith.mulf %51, %53 : vector<2x32xf32>
    %57 = arith.addf %55, %56 : vector<2x32xf32>
    %58 = math.tanh %57 : vector<2x32xf32>
    %59 = arith.mulf %54, %58 : vector<2x32xf32>
    %60 = vector.extract_strided_slice %12 {offsets = [4, 0], sizes = [2, 128], strides = [1, 1]} : vector<16x128xf32> to vector<2x128xf32>
    %cst_16 = arith.constant dense<0.000000e+00> : vector<2x128xf32>
    %61 = tpu.matmul %59, %13, %cst_16 {dimension_numbers = #tpu.dot_dimension_numbers<[1], [0], [0], [1], [0, 0, 1, 1], [], []>} : vector<2x32xf32>, vector<32x128xf32>, vector<2x128xf32> -> vector<2x128xf32>
    %62 = arith.addf %60, %61 : vector<2x128xf32>
    %63 = math.tanh %62 : vector<2x128xf32>
    %64 = arith.negf %62 : vector<2x128xf32>
    %65 = math.exp %64 : vector<2x128xf32>
    %cst_17 = arith.constant 1.000000e+00 : f32
    %66 = vector.broadcast %cst_17 : f32 to vector<2x128xf32>
    %67 = arith.addf %66, %65 : vector<2x128xf32>
    %68 = arith.divf %66, %67 : vector<2x128xf32>
    %69 = arith.select %19, %63, %68 : vector<2x128xi1>, vector<2x128xf32>
    %70 = vector.extract_strided_slice %69 {offsets = [0, 0], sizes = [2, 32], strides = [1, 1]} : vector<2x128xf32> to vector<2x32xf32>
    %71 = vector.extract_strided_slice %69 {offsets = [0, 32], sizes = [2, 32], strides = [1, 1]} : vector<2x128xf32> to vector<2x32xf32>
    %72 = vector.extract_strided_slice %69 {offsets = [0, 64], sizes = [2, 32], strides = [1, 1]} : vector<2x128xf32> to vector<2x32xf32>
    %73 = vector.extract_strided_slice %69 {offsets = [0, 96], sizes = [2, 32], strides = [1, 1]} : vector<2x128xf32> to vector<2x32xf32>
    %74 = arith.mulf %71, %57 : vector<2x32xf32>
    %75 = arith.mulf %70, %72 : vector<2x32xf32>
    %76 = arith.addf %74, %75 : vector<2x32xf32>
    %77 = math.tanh %76 : vector<2x32xf32>
    %78 = arith.mulf %73, %77 : vector<2x32xf32>
    %79 = vector.extract_strided_slice %12 {offsets = [6, 0], sizes = [2, 128], strides = [1, 1]} : vector<16x128xf32> to vector<2x128xf32>
    %cst_18 = arith.constant dense<0.000000e+00> : vector<2x128xf32>
    %80 = tpu.matmul %78, %13, %cst_18 {dimension_numbers = #tpu.dot_dimension_numbers<[1], [0], [0], [1], [0, 0, 1, 1], [], []>} : vector<2x32xf32>, vector<32x128xf32>, vector<2x128xf32> -> vector<2x128xf32>
    %81 = arith.addf %79, %80 : vector<2x128xf32>
    %82 = math.tanh %81 : vector<2x128xf32>
    %83 = arith.negf %81 : vector<2x128xf32>
    %84 = math.exp %83 : vector<2x128xf32>
    %cst_19 = arith.constant 1.000000e+00 : f32
    %85 = vector.broadcast %cst_19 : f32 to vector<2x128xf32>
    %86 = arith.addf %85, %84 : vector<2x128xf32>
    %87 = arith.divf %85, %86 : vector<2x128xf32>
    %88 = arith.select %19, %82, %87 : vector<2x128xi1>, vector<2x128xf32>
    %89 = vector.extract_strided_slice %88 {offsets = [0, 0], sizes = [2, 32], strides = [1, 1]} : vector<2x128xf32> to vector<2x32xf32>
    %90 = vector.extract_strided_slice %88 {offsets = [0, 32], sizes = [2, 32], strides = [1, 1]} : vector<2x128xf32> to vector<2x32xf32>
    %91 = vector.extract_strided_slice %88 {offsets = [0, 64], sizes = [2, 32], strides = [1, 1]} : vector<2x128xf32> to vector<2x32xf32>
    %92 = vector.extract_strided_slice %88 {offsets = [0, 96], sizes = [2, 32], strides = [1, 1]} : vector<2x128xf32> to vector<2x32xf32>
    %93 = arith.mulf %90, %76 : vector<2x32xf32>
    %94 = arith.mulf %89, %91 : vector<2x32xf32>
    %95 = arith.addf %93, %94 : vector<2x32xf32>
    %96 = math.tanh %95 : vector<2x32xf32>
    %97 = arith.mulf %92, %96 : vector<2x32xf32>
    %98 = vector.extract_strided_slice %12 {offsets = [8, 0], sizes = [2, 128], strides = [1, 1]} : vector<16x128xf32> to vector<2x128xf32>
    %cst_20 = arith.constant dense<0.000000e+00> : vector<2x128xf32>
    %99 = tpu.matmul %97, %13, %cst_20 {dimension_numbers = #tpu.dot_dimension_numbers<[1], [0], [0], [1], [0, 0, 1, 1], [], []>} : vector<2x32xf32>, vector<32x128xf32>, vector<2x128xf32> -> vector<2x128xf32>
    %100 = arith.addf %98, %99 : vector<2x128xf32>
    %101 = math.tanh %100 : vector<2x128xf32>
    %102 = arith.negf %100 : vector<2x128xf32>
    %103 = math.exp %102 : vector<2x128xf32>
    %cst_21 = arith.constant 1.000000e+00 : f32
    %104 = vector.broadcast %cst_21 : f32 to vector<2x128xf32>
    %105 = arith.addf %104, %103 : vector<2x128xf32>
    %106 = arith.divf %104, %105 : vector<2x128xf32>
    %107 = arith.select %19, %101, %106 : vector<2x128xi1>, vector<2x128xf32>
    %108 = vector.extract_strided_slice %107 {offsets = [0, 0], sizes = [2, 32], strides = [1, 1]} : vector<2x128xf32> to vector<2x32xf32>
    %109 = vector.extract_strided_slice %107 {offsets = [0, 32], sizes = [2, 32], strides = [1, 1]} : vector<2x128xf32> to vector<2x32xf32>
    %110 = vector.extract_strided_slice %107 {offsets = [0, 64], sizes = [2, 32], strides = [1, 1]} : vector<2x128xf32> to vector<2x32xf32>
    %111 = vector.extract_strided_slice %107 {offsets = [0, 96], sizes = [2, 32], strides = [1, 1]} : vector<2x128xf32> to vector<2x32xf32>
    %112 = arith.mulf %109, %95 : vector<2x32xf32>
    %113 = arith.mulf %108, %110 : vector<2x32xf32>
    %114 = arith.addf %112, %113 : vector<2x32xf32>
    %115 = math.tanh %114 : vector<2x32xf32>
    %116 = arith.mulf %111, %115 : vector<2x32xf32>
    %117 = vector.extract_strided_slice %12 {offsets = [10, 0], sizes = [2, 128], strides = [1, 1]} : vector<16x128xf32> to vector<2x128xf32>
    %cst_22 = arith.constant dense<0.000000e+00> : vector<2x128xf32>
    %118 = tpu.matmul %116, %13, %cst_22 {dimension_numbers = #tpu.dot_dimension_numbers<[1], [0], [0], [1], [0, 0, 1, 1], [], []>} : vector<2x32xf32>, vector<32x128xf32>, vector<2x128xf32> -> vector<2x128xf32>
    %119 = arith.addf %117, %118 : vector<2x128xf32>
    %120 = math.tanh %119 : vector<2x128xf32>
    %121 = arith.negf %119 : vector<2x128xf32>
    %122 = math.exp %121 : vector<2x128xf32>
    %cst_23 = arith.constant 1.000000e+00 : f32
    %123 = vector.broadcast %cst_23 : f32 to vector<2x128xf32>
    %124 = arith.addf %123, %122 : vector<2x128xf32>
    %125 = arith.divf %123, %124 : vector<2x128xf32>
    %126 = arith.select %19, %120, %125 : vector<2x128xi1>, vector<2x128xf32>
    %127 = vector.extract_strided_slice %126 {offsets = [0, 0], sizes = [2, 32], strides = [1, 1]} : vector<2x128xf32> to vector<2x32xf32>
    %128 = vector.extract_strided_slice %126 {offsets = [0, 32], sizes = [2, 32], strides = [1, 1]} : vector<2x128xf32> to vector<2x32xf32>
    %129 = vector.extract_strided_slice %126 {offsets = [0, 64], sizes = [2, 32], strides = [1, 1]} : vector<2x128xf32> to vector<2x32xf32>
    %130 = vector.extract_strided_slice %126 {offsets = [0, 96], sizes = [2, 32], strides = [1, 1]} : vector<2x128xf32> to vector<2x32xf32>
    %131 = arith.mulf %128, %114 : vector<2x32xf32>
    %132 = arith.mulf %127, %129 : vector<2x32xf32>
    %133 = arith.addf %131, %132 : vector<2x32xf32>
    %134 = math.tanh %133 : vector<2x32xf32>
    %135 = arith.mulf %130, %134 : vector<2x32xf32>
    %136 = vector.extract_strided_slice %12 {offsets = [12, 0], sizes = [2, 128], strides = [1, 1]} : vector<16x128xf32> to vector<2x128xf32>
    %cst_24 = arith.constant dense<0.000000e+00> : vector<2x128xf32>
    %137 = tpu.matmul %135, %13, %cst_24 {dimension_numbers = #tpu.dot_dimension_numbers<[1], [0], [0], [1], [0, 0, 1, 1], [], []>} : vector<2x32xf32>, vector<32x128xf32>, vector<2x128xf32> -> vector<2x128xf32>
    %138 = arith.addf %136, %137 : vector<2x128xf32>
    %139 = math.tanh %138 : vector<2x128xf32>
    %140 = arith.negf %138 : vector<2x128xf32>
    %141 = math.exp %140 : vector<2x128xf32>
    %cst_25 = arith.constant 1.000000e+00 : f32
    %142 = vector.broadcast %cst_25 : f32 to vector<2x128xf32>
    %143 = arith.addf %142, %141 : vector<2x128xf32>
    %144 = arith.divf %142, %143 : vector<2x128xf32>
    %145 = arith.select %19, %139, %144 : vector<2x128xi1>, vector<2x128xf32>
    %146 = vector.extract_strided_slice %145 {offsets = [0, 0], sizes = [2, 32], strides = [1, 1]} : vector<2x128xf32> to vector<2x32xf32>
    %147 = vector.extract_strided_slice %145 {offsets = [0, 32], sizes = [2, 32], strides = [1, 1]} : vector<2x128xf32> to vector<2x32xf32>
    %148 = vector.extract_strided_slice %145 {offsets = [0, 64], sizes = [2, 32], strides = [1, 1]} : vector<2x128xf32> to vector<2x32xf32>
    %149 = vector.extract_strided_slice %145 {offsets = [0, 96], sizes = [2, 32], strides = [1, 1]} : vector<2x128xf32> to vector<2x32xf32>
    %150 = arith.mulf %147, %133 : vector<2x32xf32>
    %151 = arith.mulf %146, %148 : vector<2x32xf32>
    %152 = arith.addf %150, %151 : vector<2x32xf32>
    %153 = math.tanh %152 : vector<2x32xf32>
    %154 = arith.mulf %149, %153 : vector<2x32xf32>
    %155 = vector.extract_strided_slice %12 {offsets = [14, 0], sizes = [2, 128], strides = [1, 1]} : vector<16x128xf32> to vector<2x128xf32>
    %cst_26 = arith.constant dense<0.000000e+00> : vector<2x128xf32>
    %156 = tpu.matmul %154, %13, %cst_26 {dimension_numbers = #tpu.dot_dimension_numbers<[1], [0], [0], [1], [0, 0, 1, 1], [], []>} : vector<2x32xf32>, vector<32x128xf32>, vector<2x128xf32> -> vector<2x128xf32>
    %157 = arith.addf %155, %156 : vector<2x128xf32>
    %158 = math.tanh %157 : vector<2x128xf32>
    %159 = arith.negf %157 : vector<2x128xf32>
    %160 = math.exp %159 : vector<2x128xf32>
    %cst_27 = arith.constant 1.000000e+00 : f32
    %161 = vector.broadcast %cst_27 : f32 to vector<2x128xf32>
    %162 = arith.addf %161, %160 : vector<2x128xf32>
    %163 = arith.divf %161, %162 : vector<2x128xf32>
    %164 = arith.select %19, %158, %163 : vector<2x128xi1>, vector<2x128xf32>
    %165 = vector.extract_strided_slice %164 {offsets = [0, 0], sizes = [2, 32], strides = [1, 1]} : vector<2x128xf32> to vector<2x32xf32>
    %166 = vector.extract_strided_slice %164 {offsets = [0, 32], sizes = [2, 32], strides = [1, 1]} : vector<2x128xf32> to vector<2x32xf32>
    %167 = vector.extract_strided_slice %164 {offsets = [0, 64], sizes = [2, 32], strides = [1, 1]} : vector<2x128xf32> to vector<2x32xf32>
    %168 = vector.extract_strided_slice %164 {offsets = [0, 96], sizes = [2, 32], strides = [1, 1]} : vector<2x128xf32> to vector<2x32xf32>
    %169 = arith.mulf %166, %152 : vector<2x32xf32>
    %170 = arith.mulf %165, %167 : vector<2x32xf32>
    %171 = arith.addf %169, %170 : vector<2x32xf32>
    %172 = math.tanh %171 : vector<2x32xf32>
    %173 = arith.mulf %168, %172 : vector<2x32xf32>
    %174 = tpu.concatenate %40, %59, %78, %97, %116, %135, %154, %173 in 1 : vector<2x32xf32>, vector<2x32xf32>, vector<2x32xf32>, vector<2x32xf32>, vector<2x32xf32>, vector<2x32xf32>, vector<2x32xf32>, vector<2x32xf32> -> vector<2x256xf32>
    %c0_28 = arith.constant 0 : index
    %c0_29 = arith.constant 0 : index
    %175 = vector.load %arg5[%c0_28, %c0_29] : memref<256x8xf32, #tpu.memory_space<vmem>>, vector<256x8xf32>
    %cst_30 = arith.constant dense<0.000000e+00> : vector<2x8xf32>
    %176 = tpu.matmul %174, %175, %cst_30 {dimension_numbers = #tpu.dot_dimension_numbers<[1], [0], [0], [1], [0, 0, 1, 1], [], []>} : vector<2x256xf32>, vector<256x8xf32>, vector<2x8xf32> -> vector<2x8xf32>
    %c0_31 = arith.constant 0 : index
    %c0_32 = arith.constant 0 : index
    %177 = vector.load %arg6[%c0_31, %c0_32] : memref<1x8xf32, #tpu.memory_space<vmem>>, vector<1x8xf32>
    %178 = vector.broadcast %177 : vector<1x8xf32> to vector<2x8xf32>
    %179 = arith.addf %176, %178 : vector<2x8xf32>
    %cst_33 = arith.constant dense<0xFF800000> : vector<2xf32>
    %180 = vector.multi_reduction <maximumf>, %179, %cst_33 [1] : vector<2x8xf32> to vector<2xf32>
    %181 = vector.shape_cast %180 : vector<2xf32> to vector<2x1xf32>
    %182 = vector.broadcast %181 : vector<2x1xf32> to vector<2x8xf32>
    %183 = arith.subf %179, %182 : vector<2x8xf32>
    %184 = math.exp %183 : vector<2x8xf32>
    %cst_34 = arith.constant dense<0.000000e+00> : vector<2xf32>
    %185 = vector.multi_reduction <add>, %184, %cst_34 [1] : vector<2x8xf32> to vector<2xf32>
    %186 = vector.shape_cast %185 : vector<2xf32> to vector<2x1xf32>
    %187 = math.log %186 : vector<2x1xf32>
    %188 = vector.broadcast %187 : vector<2x1xf32> to vector<2x8xf32>
    %189 = arith.subf %183, %188 : vector<2x8xf32>
    %c0_35 = arith.constant 0 : index
    %c0_36 = arith.constant 0 : index
    %190 = vector.load %arg7[%c0_35, %c0_36] : memref<2x8xf32, #tpu.memory_space<vmem>>, vector<2x8xf32>
    tpu.vector_store %arg7[%c0_35, %c0_36], %189 {strides = array<i32>} : memref<2x8xf32, #tpu.memory_space<vmem>>, vector<2x8xf32>,
    return
  }
}

</mosaic_0001>

<llo_original>
// kernel: tpu_custom_call.1
$region0: #{tpu_custom_call.1}
  #allocation0 [shape = 'u32[]', space=smem, size = 0x4, offset = 0x4, fixed_abs, tag = 'smem constant byte address 0x4 - core index']
  #allocation1 [shape = 'u32[72,128]{1,0:T(1,128)}', space=vmem, size = 0x9000, scoped, tag = 'internal scratch']
  %s0 = inlined_call_operand.vmem [shape: s32[16,1], index: 0, kind: input, shape index: {}]
  %s1 = inlined_call_operand.vmem [shape: f32[50,32], index: 1, kind: input, shape index: {}]
  %s2 = inlined_call_operand.vmem [shape: f32[32,128], index: 2, kind: input, shape index: {}]
  %s3 = inlined_call_operand.vmem [shape: f32[32,128], index: 3, kind: input, shape index: {}]
  %s4 = inlined_call_operand.vmem [shape: f32[1,128], index: 4, kind: input, shape index: {}]
  %s5 = inlined_call_operand.vmem [shape: f32[256,8], index: 5, kind: input, shape index: {}]
  %s6 = inlined_call_operand.vmem [shape: f32[1,8], index: 6, kind: input, shape index: {}]
  %s7 = inlined_call_operand.hbm [shape: f32[2,8], index: 7, kind: output, shape index: {}]
  %s8 = sld [smem:[#allocation0]]
  $region38: #{tpu_custom_call.1} parent=0
    _
  %s10 = ssub.s32 1, %s8
  %s11 = scalar_select 0, %s10, %s8
  $region1: #{tpu_custom_call.1} parent=0
    #allocation2 [shape = 'u8[1024]{0}', space=vmem, size = 0x400, scoped, tag = 'output window, operand 0, single buffered']
    #allocation3 [shape = 's32[1]{0}', space=sflag, size = 0x4, scoped, tag = 'scoped memory for tpu_custom_call.1']
    %12 = vsyncpa [#allocation3], 0
    // Predicated region
    $region2: #{tpu_custom_call.1} parent=1 // pred_check
      _
    $region3: #{tpu_custom_call.1} parent=1 // pred_check_branch
      %14 = sbr.rel (0) target = $region5
    $region4: #{tpu_custom_call.1} parent=1 // pred_region
      _
    $region5: #{tpu_custom_call.1} parent=1 // pred_fallthru
      _
    // Predicated region
    $region6: #{tpu_custom_call.1} parent=1 // pred_check
      _
    $region7: #{tpu_custom_call.1} parent=1 // pred_check_branch
      %16 = sbr.rel (0) target = $region9
    $region8: #{tpu_custom_call.1} parent=1 // pred_region
      _
    $region9: #{tpu_custom_call.1} parent=1 // pred_fallthru
      _
    // Predicated region
    $region10: #{tpu_custom_call.1} parent=1 // pred_check
      _
    $region11: #{tpu_custom_call.1} parent=1 // pred_check_branch
      %18 = sbr.rel (0) target = $region13
    $region12: #{tpu_custom_call.1} parent=1 // pred_region
      _
    $region13: #{tpu_custom_call.1} parent=1 // pred_fallthru
      _
    // Predicated region
    $region14: #{tpu_custom_call.1} parent=1 // pred_check
      _
    $region15: #{tpu_custom_call.1} parent=1 // pred_check_branch
      %20 = sbr.rel (0) target = $region17
    $region16: #{tpu_custom_call.1} parent=1 // pred_region
      _
    $region17: #{tpu_custom_call.1} parent=1 // pred_fallthru
      _
    // Predicated region
    $region18: #{tpu_custom_call.1} parent=1 // pred_check
      _
    $region19: #{tpu_custom_call.1} parent=1 // pred_check_branch
      %22 = sbr.rel (0) target = $region21
    $region20: #{tpu_custom_call.1} parent=1 // pred_region
      _
    $region21: #{tpu_custom_call.1} parent=1 // pred_fallthru
      _
    // Predicated region
    $region22: #{tpu_custom_call.1} parent=1 // pred_check
      _
    $region23: #{tpu_custom_call.1} parent=1 // pred_check_branch
      %24 = sbr.rel (0) target = $region25
    $region24: #{tpu_custom_call.1} parent=1 // pred_region
      _
    $region25: #{tpu_custom_call.1} parent=1 // pred_fallthru
      _
    // Predicated region
    $region26: #{tpu_custom_call.1} parent=1 // pred_check
      _
    $region27: #{tpu_custom_call.1} parent=1 // pred_check_branch
      %26 = sbr.rel (0) target = $region29
    $region28: #{tpu_custom_call.1} parent=1 // pred_region
      _
    $region29: #{tpu_custom_call.1} parent=1 // pred_fallthru
      _
    %v27 = vld [vmem:[%s0] sm:$0xff]
    %v28 = vld [vmem:[%s0 + $0x8] sm:$0xff]
    %v29 = vlaneseq
    %v30 = vand.u32 %v29, 127
    %31 = vset.pattern.permute.xlu0 0
    %32 = vperm.xlu0 %31, %v27
    %v33 = vpop.permute.xlu0 %32
    %34 = vset.pattern.permute.xlu0 0
    %35 = vperm.xlu0 %34, %v28
    %v36 = vpop.permute.xlu0 %35
    %vm37 = vcmp.eq.s32.totalorder %v33, %v30
    %vm38 = vcmp.eq.s32.totalorder %v36, %v30
    %v39 = vsel %vm37, 1, 0
    %v40 = vsel %vm38, 1, 0
    %v41 = vcvt.s32.f32 %v39
    %v42 = vcvt.s32.f32 %v40
    %v43 = vld [vmem:[%s1] sm:$0xff]
    %v44 = vld [vmem:[%s1 + $0x8] sm:$0xff]
    %v45 = vld [vmem:[%s1 + $0x10] sm:$0xff]
    %v46 = vld [vmem:[%s1 + $0x18] sm:$0xff]
    %v47 = vld [vmem:[%s1 + $0x20] sm:$0xff]
    %v48 = vld [vmem:[%s1 + $0x28] sm:$0xff]
    %v49 = vld [vmem:[%s1 + $0x30] sm:$0x3]
    %vm50 = vcmask 408576
    %v52 = vsel %vm50, %v41, 0
    %v55 = vsel %vm50, %v42, 0
    %vm57 = vcmask 1041408
    %v59 = vsel %vm57, %v49, 0
    %61 = vmatpush.msra.mxu0 0.0
    %62 = vmatpush.msra.mxu0 0.0
    %63 = vmatpush.msra.mxu0 0.0
    %64 = vmatpush.msra.mxu0 0.0
    %65 = vmatpush.msra.mxu0 0.0
    %66 = vmatpush.msra.mxu0 0.0
    %67 = vmatpush.msra.mxu0 0.0
    %68 = vmatpush.msra.mxu0 0.0
    %69 = vmatpush.msra.mxu0 0.0
    %70 = vmatpush.msra.mxu0 %v59
    %71 = vmatpush.msra.mxu0 %v48
    %72 = vmatpush.msra.mxu0 %v47
    %73 = vmatpush.msra.mxu0 %v46
    %74 = vmatpush.msra.mxu0 %v45
    %75 = vmatpush.msra.mxu0 %v44
    %76 = vmatpush.msra.mxu0 %v43
    %77 = vmatmul.f32.gmra.mxu0 %v52
    %v78 = vpop.f32.mrf.mxu0
    %v79 = vadd.f32 0.0, %v78
    %80 = vmatmul.f32.gmra.mxu0 %v55
    %v81 = vpop.f32.mrf.mxu0
    %v82 = vadd.f32 0.0, %v81
    %83 = vdwg.mxu0
    %v84 = vld [vmem:[%s2] sm:$0xff]
    %v85 = vld [vmem:[%s2 + $0x8] sm:$0xff]
    %v86 = vld [vmem:[%s2 + $0x10] sm:$0xff]
    %v87 = vld [vmem:[%s2 + $0x18] sm:$0xff]
    %v88 = vld [vmem:[%s4] sm:$0x1]
    %v90 = vperm.slane %v88, 0
    %vm92 = vcmask 261120
    %v94 = vsel %vm92, %v79, 0
    %v97 = vsel %vm92, %v82, 0
    %99 = vmatpush.msra.mxu0 0.0
    %100 = vmatpush.msra.mxu0 0.0
    %101 = vmatpush.msra.mxu0 0.0
    %102 = vmatpush.msra.mxu0 0.0
    %103 = vmatpush.msra.mxu0 0.0
    %104 = vmatpush.msra.mxu0 0.0
    %105 = vmatpush.msra.mxu0 0.0
    %106 = vmatpush.msra.mxu0 0.0
    %107 = vmatpush.msra.mxu0 0.0
    %108 = vmatpush.msra.mxu0 0.0
    %109 = vmatpush.msra.mxu0 0.0
    %110 = vmatpush.msra.mxu0 0.0
    %111 = vmatpush.msra.mxu0 %v87
    %112 = vmatpush.msra.mxu0 %v86
    %113 = vmatpush.msra.mxu0 %v85
    %114 = vmatpush.msra.mxu0 %v84
    %115 = vmatmul.f32.gmra.mxu0 %v94
    %v116 = vpop.f32.mrf.mxu0
    %v117 = vadd.f32 %v90, %v116
    %118 = vmatmul.f32.gmra.mxu0 %v97
    %v119 = vpop.f32.mrf.mxu0
    %v120 = vadd.f32 %v90, %v119
    %121 = vdwg.mxu0
    %v122 = vld [vmem:[%s3] sm:$0xff]
    %v123 = vld [vmem:[%s3 + $0x8] sm:$0xff]
    %v124 = vld [vmem:[%s3 + $0x10] sm:$0xff]
    %v125 = vld [vmem:[%s3 + $0x18] sm:$0xff]
    %vm126 = vcmp.ge.s32.totalorder %v30, 64
    %vm127 = vcmp.lt.s32.totalorder %v30, 96
    %vm128 = vmand %vm126, %vm127
    %v130 = vsel %vm92, 0.0, 0
    %132 = vmatpush.msra.mxu0 0.0
    %133 = vmatpush.msra.mxu0 0.0
    %134 = vmatpush.msra.mxu0 0.0
    %135 = vmatpush.msra.mxu0 0.0
    %136 = vmatpush.msra.mxu0 0.0
    %137 = vmatpush.msra.mxu0 0.0
    %138 = vmatpush.msra.mxu0 0.0
    %139 = vmatpush.msra.mxu0 0.0
    %140 = vmatpush.msra.mxu0 0.0
    %141 = vmatpush.msra.mxu0 0.0
    %142 = vmatpush.msra.mxu0 0.0
    %143 = vmatpush.msra.mxu0 0.0
    %144 = vmatpush.msra.mxu0 %v125
    %145 = vmatpush.msra.mxu0 %v124
    %146 = vmatpush.msra.mxu0 %v123
    %147 = vmatpush.msra.mxu0 %v122
    %148 = vmatmul.f32.gmra.mxu0 %v130
    %v149 = vpop.f32.mrf.mxu0
    %v150 = vadd.f32 0.0, %v149
    %151 = vdwg.mxu0
    %v152 = vadd.f32 %v117, %v150
    %v153 = vtanh.pop %v152
    %v154 = vxor.u32 %v152, 2147483648
    %v155 = vmul.f32 %v154, 1.442695
    %v156 = vpow.pop %v155
    %v157 = vadd.f32 %v156, 1.0
    %v158 = vrcp.pop %v157
    %v159 = vmul.f32 %v157, %v158
    %v160 = vsub.f32 1.0, %v159
    %v161 = vmul.f32 %v158, %v160
    %v162 = vadd.f32 %v158, %v161
    %vm163 = vweird.f32 %v157
    %vm164 = vweird.f32 %v158
    %vm165 = vmor %vm163, %vm164
    %v166 = vsel %vm165, %v158, %v162
    %v167 = vand.u32 2147483647, %v157
    %vm168 = vcmp.eq.f32.partialorder %v167, 8.507059e+37
    %v169 = vand.u32 %v157, 2147483648
    %v170 = vor.u32 1.1754944e-38, %v169
    %v171 = vsel %vm168, %v170, %v166
    %v172 = vmul.f32 1.0, %v171
    %v173 = vsel %vm128, %v153, %v172
    %v174 = vmul.f32 %v173, 0.0
    %176 = vrot.lane.b32.xlu0 %v173, 64
    %v177 = vpop.permute.xlu0 %176
    %v179 = vmul.f32 %v173, %v177
    %181 = vrot.lane.b32.xlu0 %v179, 32
    %v182 = vpop.permute.xlu0 %181
    %v184 = vadd.f32 %v174, %v182
    %v185 = vtanh.pop %v184
    %187 = vrot.lane.b32.xlu0 %v185, 64
    %v188 = vpop.permute.xlu0 %187
    %v190 = vmul.f32 %v173, %v188
    %192 = vrot.lane.b32.xlu0 %v190, 32
    %v193 = vpop.permute.xlu0 %192
    %v194 = vsel %vm92, %v193, 0
    %196 = vmatpush.msra.mxu0 0.0
    %197 = vmatpush.msra.mxu0 0.0
    %198 = vmatpush.msra.mxu0 0.0
    %199 = vmatpush.msra.mxu0 0.0
    %200 = vmatpush.msra.mxu0 0.0
    %201 = vmatpush.msra.mxu0 0.0
    %202 = vmatpush.msra.mxu0 0.0
    %203 = vmatpush.msra.mxu0 0.0
    %204 = vmatpush.msra.mxu0 0.0
    %205 = vmatpush.msra.mxu0 0.0
    %206 = vmatpush.msra.mxu0 0.0
    %207 = vmatpush.msra.mxu0 0.0
    %208 = vmatpush.msra.mxu0 %v125
    %209 = vmatpush.msra.mxu0 %v124
    %210 = vmatpush.msra.mxu0 %v123
    %211 = vmatpush.msra.mxu0 %v122
    %212 = vmatmul.f32.gmra.mxu0 %v194
    %v213 = vpop.f32.mrf.mxu0
    %v214 = vadd.f32 0.0, %v213
    %215 = vdwg.mxu0
    %v217 = vrot.slane %v214, 6
    %v219 = vadd.f32 %v117, %v217
    %v220 = vtanh.pop %v219
    %v221 = vxor.u32 %v219, 2147483648
    %v222 = vmul.f32 %v221, 1.442695
    %v223 = vpow.pop %v222
    %v224 = vadd.f32 %v223, 1.0
    %v225 = vrcp.pop %v224
    %v226 = vmul.f32 %v224, %v225
    %v227 = vsub.f32 1.0, %v226
    %v228 = vmul.f32 %v225, %v227
    %v229 = vadd.f32 %v225, %v228
    %vm230 = vweird.f32 %v224
    %vm231 = vweird.f32 %v225
    %vm232 = vmor %vm230, %vm231
    %v233 = vsel %vm232, %v225, %v229
    %v234 = vand.u32 2147483647, %v224
    %vm235 = vcmp.eq.f32.partialorder %v234, 8.507059e+37
    %v236 = vand.u32 %v224, 2147483648
    %v237 = vor.u32 1.1754944e-38, %v236
    %v238 = vsel %vm235, %v237, %v233
    %v239 = vmul.f32 1.0, %v238
    %v240 = vsel %vm128, %v220, %v239
    %v242 = vrot.slane %v184, 6
    %v244 = vmul.f32 %v240, %v242
    %246 = vrot.lane.b32.xlu0 %v240, 64
    %v247 = vpop.permute.xlu0 %246
    %v249 = vmul.f32 %v240, %v247
    %251 = vrot.lane.b32.xlu0 %v249, 32
    %v252 = vpop.permute.xlu0 %251
    %v254 = vadd.f32 %v244, %v252
    %v255 = vtanh.pop %v254
    %257 = vrot.lane.b32.xlu0 %v255, 64
    %v258 = vpop.permute.xlu0 %257
    %v260 = vmul.f32 %v240, %v258
    %v262 = vrot.slane %v260, 2
    %263 = vrot.lane.b32.xlu0 %v262, 32
    %v264 = vpop.permute.xlu0 %263
    %v265 = vsel %vm92, %v264, 0
    %267 = vmatpush.msra.mxu0 0.0
    %268 = vmatpush.msra.mxu0 0.0
    %269 = vmatpush.msra.mxu0 0.0
    %270 = vmatpush.msra.mxu0 0.0
    %271 = vmatpush.msra.mxu0 0.0
    %272 = vmatpush.msra.mxu0 0.0
    %273 = vmatpush.msra.mxu0 0.0
    %274 = vmatpush.msra.mxu0 0.0
    %275 = vmatpush.msra.mxu0 0.0
    %276 = vmatpush.msra.mxu0 0.0
    %277 = vmatpush.msra.mxu0 0.0
    %278 = vmatpush.msra.mxu0 0.0
    %279 = vmatpush.msra.mxu0 %v125
    %280 = vmatpush.msra.mxu0 %v124
    %281 = vmatpush.msra.mxu0 %v123
    %282 = vmatpush.msra.mxu0 %v122
    %283 = vmatmul.f32.gmra.mxu0 %v265
    %v284 = vpop.f32.mrf.mxu0
    %v285 = vadd.f32 0.0, %v284
    %286 = vdwg.mxu0
    %v288 = vrot.slane %v285, 4
    %v290 = vadd.f32 %v117, %v288
    %v291 = vtanh.pop %v290
    %v292 = vxor.u32 %v290, 2147483648
    %v293 = vmul.f32 %v292, 1.442695
    %v294 = vpow.pop %v293
    %v295 = vadd.f32 %v294, 1.0
    %v296 = vrcp.pop %v295
    %v297 = vmul.f32 %v295, %v296
    %v298 = vsub.f32 1.0, %v297
    %v299 = vmul.f32 %v296, %v298
    %v300 = vadd.f32 %v296, %v299
    %vm301 = vweird.f32 %v295
    %vm302 = vweird.f32 %v296
    %vm303 = vmor %vm301, %vm302
    %v304 = vsel %vm303, %v296, %v300
    %v305 = vand.u32 2147483647, %v295
    %vm306 = vcmp.eq.f32.partialorder %v305, 8.507059e+37
    %v307 = vand.u32 %v295, 2147483648
    %v308 = vor.u32 1.1754944e-38, %v307
    %v309 = vsel %vm306, %v308, %v304
    %v310 = vmul.f32 1.0, %v309
    %v311 = vsel %vm128, %v291, %v310
    %v313 = vrot.slane %v254, 6
    %v315 = vmul.f32 %v311, %v313
    %317 = vrot.lane.b32.xlu0 %v311, 64
    %v318 = vpop.permute.xlu0 %317
    %v320 = vmul.f32 %v311, %v318
    %322 = vrot.lane.b32.xlu0 %v320, 32
    %v323 = vpop.permute.xlu0 %322
    %v325 = vadd.f32 %v315, %v323
    %v326 = vtanh.pop %v325
    %328 = vrot.lane.b32.xlu0 %v326, 64
    %v329 = vpop.permute.xlu0 %328
    %v331 = vmul.f32 %v311, %v329
    %v333 = vrot.slane %v331, 4
    %334 = vrot.lane.b32.xlu0 %v333, 32
    %v335 = vpop.permute.xlu0 %334
    %v336 = vsel %vm92, %v335, 0
    %338 = vmatpush.msra.mxu0 0.0
    %339 = vmatpush.msra.mxu0 0.0
    %340 = vmatpush.msra.mxu0 0.0
    %341 = vmatpush.msra.mxu0 0.0
    %342 = vmatpush.msra.mxu0 0.0
    %343 = vmatpush.msra.mxu0 0.0
    %344 = vmatpush.msra.mxu0 0.0
    %345 = vmatpush.msra.mxu0 0.0
    %346 = vmatpush.msra.mxu0 0.0
    %347 = vmatpush.msra.mxu0 0.0
    %348 = vmatpush.msra.mxu0 0.0
    %349 = vmatpush.msra.mxu0 0.0
    %350 = vmatpush.msra.mxu0 %v125
    %351 = vmatpush.msra.mxu0 %v124
    %352 = vmatpush.msra.mxu0 %v123
    %353 = vmatpush.msra.mxu0 %v122
    %354 = vmatmul.f32.gmra.mxu0 %v336
    %v355 = vpop.f32.mrf.mxu0
    %v356 = vadd.f32 0.0, %v355
    %357 = vdwg.mxu0
    %v359 = vrot.slane %v356, 2
    %v361 = vadd.f32 %v117, %v359
    %v362 = vtanh.pop %v361
    %v363 = vxor.u32 %v361, 2147483648
    %v364 = vmul.f32 %v363, 1.442695
    %v365 = vpow.pop %v364
    %v366 = vadd.f32 %v365, 1.0
    %v367 = vrcp.pop %v366
    %v368 = vmul.f32 %v366, %v367
    %v369 = vsub.f32 1.0, %v368
    %v370 = vmul.f32 %v367, %v369
    %v371 = vadd.f32 %v367, %v370
    %vm372 = vweird.f32 %v366
    %vm373 = vweird.f32 %v367
    %vm374 = vmor %vm372, %vm373
    %v375 = vsel %vm374, %v367, %v371
    %v376 = vand.u32 2147483647, %v366
    %vm377 = vcmp.eq.f32.partialorder %v376, 8.507059e+37
    %v378 = vand.u32 %v366, 2147483648
    %v379 = vor.u32 1.1754944e-38, %v378
    %v380 = vsel %vm377, %v379, %v375
    %v381 = vmul.f32 1.0, %v380
    %v382 = vsel %vm128, %v362, %v381
    %v384 = vrot.slane %v325, 6
    %v386 = vmul.f32 %v382, %v384
    %388 = vrot.lane.b32.xlu0 %v382, 64
    %v389 = vpop.permute.xlu0 %388
    %v391 = vmul.f32 %v382, %v389
    %393 = vrot.lane.b32.xlu0 %v391, 32
    %v394 = vpop.permute.xlu0 %393
    %v396 = vadd.f32 %v386, %v394
    %v397 = vtanh.pop %v396
    %399 = vrot.lane.b32.xlu0 %v397, 64
    %v400 = vpop.permute.xlu0 %399
    %v402 = vmul.f32 %v382, %v400
    %v404 = vrot.slane %v402, 6
    %405 = vrot.lane.b32.xlu0 %v404, 32
    %v406 = vpop.permute.xlu0 %405
    %v407 = vsel %vm92, %v406, 0
    %409 = vmatpush.msra.mxu0 0.0
    %410 = vmatpush.msra.mxu0 0.0
    %411 = vmatpush.msra.mxu0 0.0
    %412 = vmatpush.msra.mxu0 0.0
    %413 = vmatpush.msra.mxu0 0.0
    %414 = vmatpush.msra.mxu0 0.0
    %415 = vmatpush.msra.mxu0 0.0
    %416 = vmatpush.msra.mxu0 0.0
    %417 = vmatpush.msra.mxu0 0.0
    %418 = vmatpush.msra.mxu0 0.0
    %419 = vmatpush.msra.mxu0 0.0
    %420 = vmatpush.msra.mxu0 0.0
    %421 = vmatpush.msra.mxu0 %v125
    %422 = vmatpush.msra.mxu0 %v124
    %423 = vmatpush.msra.mxu0 %v123
    %424 = vmatpush.msra.mxu0 %v122
    %425 = vmatmul.f32.gmra.mxu0 %v407
    %v426 = vpop.f32.mrf.mxu0
    %v427 = vadd.f32 0.0, %v426
    %428 = vdwg.mxu0
    %v429 = vadd.f32 %v120, %v427
    %v430 = vtanh.pop %v429
    %v431 = vxor.u32 %v429, 2147483648
    %v432 = vmul.f32 %v431, 1.442695
    %v433 = vpow.pop %v432
    %v434 = vadd.f32 %v433, 1.0
    %v435 = vrcp.pop %v434
    %v436 = vmul.f32 %v434, %v435
    %v437 = vsub.f32 1.0, %v436
    %v438 = vmul.f32 %v435, %v437
    %v439 = vadd.f32 %v435, %v438
    %vm440 = vweird.f32 %v434
    %vm441 = vweird.f32 %v435
    %vm442 = vmor %vm440, %vm441
    %v443 = vsel %vm442, %v435, %v439
    %v444 = vand.u32 2147483647, %v434
    %vm445 = vcmp.eq.f32.partialorder %v444, 8.507059e+37
    %v446 = vand.u32 %v434, 2147483648
    %v447 = vor.u32 1.1754944e-38, %v446
    %v448 = vsel %vm445, %v447, %v443
    %v449 = vmul.f32 1.0, %v448
    %v450 = vsel %vm128, %v430, %v449
    %v452 = vrot.slane %v396, 6
    %v454 = vmul.f32 %v450, %v452
    %456 = vrot.lane.b32.xlu0 %v450, 64
    %v457 = vpop.permute.xlu0 %456
    %v459 = vmul.f32 %v450, %v457
    %461 = vrot.lane.b32.xlu0 %v459, 32
    %v462 = vpop.permute.xlu0 %461
    %v464 = vadd.f32 %v454, %v462
    %v465 = vtanh.pop %v464
    %467 = vrot.lane.b32.xlu0 %v465, 64
    %v468 = vpop.permute.xlu0 %467
    %v470 = vmul.f32 %v450, %v468
    %472 = vrot.lane.b32.xlu0 %v470, 32
    %v473 = vpop.permute.xlu0 %472
    %v474 = vsel %vm92, %v473, 0
    %476 = vmatpush.msra.mxu0 0.0
    %477 = vmatpush.msra.mxu0 0.0
    %478 = vmatpush.msra.mxu0 0.0
    %479 = vmatpush.msra.mxu0 0.0
    %480 = vmatpush.msra.mxu0 0.0
    %481 = vmatpush.msra.mxu0 0.0
    %482 = vmatpush.msra.mxu0 0.0
    %483 = vmatpush.msra.mxu0 0.0
    %484 = vmatpush.msra.mxu0 0.0
    %485 = vmatpush.msra.mxu0 0.0
    %486 = vmatpush.msra.mxu0 0.0
    %487 = vmatpush.msra.mxu0 0.0
    %488 = vmatpush.msra.mxu0 %v125
    %489 = vmatpush.msra.mxu0 %v124
    %490 = vmatpush.msra.mxu0 %v123
    %491 = vmatpush.msra.mxu0 %v122
    %492 = vmatmul.f32.gmra.mxu0 %v474
    %v493 = vpop.f32.mrf.mxu0
    %v494 = vadd.f32 0.0, %v493
    %495 = vdwg.mxu0
    %v497 = vrot.slane %v494, 6
    %v499 = vadd.f32 %v120, %v497
    %v500 = vtanh.pop %v499
    %v501 = vxor.u32 %v499, 2147483648
    %v502 = vmul.f32 %v501, 1.442695
    %v503 = vpow.pop %v502
    %v504 = vadd.f32 %v503, 1.0
    %v505 = vrcp.pop %v504
    %v506 = vmul.f32 %v504, %v505
    %v507 = vsub.f32 1.0, %v506
    %v508 = vmul.f32 %v505, %v507
    %v509 = vadd.f32 %v505, %v508
    %vm510 = vweird.f32 %v504
    %vm511 = vweird.f32 %v505
    %vm512 = vmor %vm510, %vm511
    %v513 = vsel %vm512, %v505, %v509
    %v514 = vand.u32 2147483647, %v504
    %vm515 = vcmp.eq.f32.partialorder %v514, 8.507059e+37
    %v516 = vand.u32 %v504, 2147483648
    %v517 = vor.u32 1.1754944e-38, %v516
    %v518 = vsel %vm515, %v517, %v513
    %v519 = vmul.f32 1.0, %v518
    %v520 = vsel %vm128, %v500, %v519
    %v522 = vrot.slane %v464, 6
    %v524 = vmul.f32 %v520, %v522
    %526 = vrot.lane.b32.xlu0 %v520, 64
    %v527 = vpop.permute.xlu0 %526
    %v529 = vmul.f32 %v520, %v527
    %531 = vrot.lane.b32.xlu0 %v529, 32
    %v532 = vpop.permute.xlu0 %531
    %v534 = vadd.f32 %v524, %v532
    %v535 = vtanh.pop %v534
    %537 = vrot.lane.b32.xlu0 %v535, 64
    %v538 = vpop.permute.xlu0 %537
    %v540 = vmul.f32 %v520, %v538
    %v542 = vrot.slane %v540, 2
    %543 = vrot.lane.b32.xlu0 %v542, 32
    %v544 = vpop.permute.xlu0 %543
    %v545 = vsel %vm92, %v544, 0
    %547 = vmatpush.msra.mxu0 0.0
    %548 = vmatpush.msra.mxu0 0.0
    %549 = vmatpush.msra.mxu0 0.0
    %550 = vmatpush.msra.mxu0 0.0
    %551 = vmatpush.msra.mxu0 0.0
    %552 = vmatpush.msra.mxu0 0.0
    %553 = vmatpush.msra.mxu0 0.0
    %554 = vmatpush.msra.mxu0 0.0
    %555 = vmatpush.msra.mxu0 0.0
    %556 = vmatpush.msra.mxu0 0.0
    %557 = vmatpush.msra.mxu0 0.0
    %558 = vmatpush.msra.mxu0 0.0
    %559 = vmatpush.msra.mxu0 %v125
    %560 = vmatpush.msra.mxu0 %v124
    %561 = vmatpush.msra.mxu0 %v123
    %562 = vmatpush.msra.mxu0 %v122
    %563 = vmatmul.f32.gmra.mxu0 %v545
    %v564 = vpop.f32.mrf.mxu0
    %v565 = vadd.f32 0.0, %v564
    %566 = vdwg.mxu0
    %v568 = vrot.slane %v565, 4
    %v570 = vadd.f32 %v120, %v568
    %v571 = vtanh.pop %v570
    %v572 = vxor.u32 %v570, 2147483648
    %v573 = vmul.f32 %v572, 1.442695
    %v574 = vpow.pop %v573
    %v575 = vadd.f32 %v574, 1.0
    %v576 = vrcp.pop %v575
    %v577 = vmul.f32 %v575, %v576
    %v578 = vsub.f32 1.0, %v577
    %v579 = vmul.f32 %v576, %v578
    %v580 = vadd.f32 %v576, %v579
    %vm581 = vweird.f32 %v575
    %vm582 = vweird.f32 %v576
    %vm583 = vmor %vm581, %vm582
    %v584 = vsel %vm583, %v576, %v580
    %v585 = vand.u32 2147483647, %v575
    %vm586 = vcmp.eq.f32.partialorder %v585, 8.507059e+37
    %v587 = vand.u32 %v575, 2147483648
    %v588 = vor.u32 1.1754944e-38, %v587
    %v589 = vsel %vm586, %v588, %v584
    %v590 = vmul.f32 1.0, %v589
    %v591 = vsel %vm128, %v571, %v590
    %v593 = vrot.slane %v534, 6
    %v595 = vmul.f32 %v591, %v593
    %597 = vrot.lane.b32.xlu0 %v591, 64
    %v598 = vpop.permute.xlu0 %597
    %v600 = vmul.f32 %v591, %v598
    %602 = vrot.lane.b32.xlu0 %v600, 32
    %v603 = vpop.permute.xlu0 %602
    %v605 = vadd.f32 %v595, %v603
    %v606 = vtanh.pop %v605
    %608 = vrot.lane.b32.xlu0 %v606, 64
    %v609 = vpop.permute.xlu0 %608
    %v611 = vmul.f32 %v591, %v609
    %v613 = vrot.slane %v611, 4
    %614 = vrot.lane.b32.xlu0 %v613, 32
    %v615 = vpop.permute.xlu0 %614
    %v616 = vsel %vm92, %v615, 0
    %618 = vmatpush.msra.mxu0 0.0
    %619 = vmatpush.msra.mxu0 0.0
    %620 = vmatpush.msra.mxu0 0.0
    %621 = vmatpush.msra.mxu0 0.0
    %622 = vmatpush.msra.mxu0 0.0
    %623 = vmatpush.msra.mxu0 0.0
    %624 = vmatpush.msra.mxu0 0.0
    %625 = vmatpush.msra.mxu0 0.0
    %626 = vmatpush.msra.mxu0 0.0
    %627 = vmatpush.msra.mxu0 0.0
    %628 = vmatpush.msra.mxu0 0.0
    %629 = vmatpush.msra.mxu0 0.0
    %630 = vmatpush.msra.mxu0 %v125
    %631 = vmatpush.msra.mxu0 %v124
    %632 = vmatpush.msra.mxu0 %v123
    %633 = vmatpush.msra.mxu0 %v122
    %634 = vmatmul.f32.gmra.mxu0 %v616
    %v635 = vpop.f32.mrf.mxu0
    %v636 = vadd.f32 0.0, %v635
    %637 = vdwg.mxu0
    %v639 = vrot.slane %v636, 2
    %v641 = vadd.f32 %v120, %v639
    %v642 = vtanh.pop %v641
    %v643 = vxor.u32 %v641, 2147483648
    %v644 = vmul.f32 %v643, 1.442695
    %v645 = vpow.pop %v644
    %v646 = vadd.f32 %v645, 1.0
    %v647 = vrcp.pop %v646
    %v648 = vmul.f32 %v646, %v647
    %v649 = vsub.f32 1.0, %v648
    %v650 = vmul.f32 %v647, %v649
    %v651 = vadd.f32 %v647, %v650
    %vm652 = vweird.f32 %v646
    %vm653 = vweird.f32 %v647
    %vm654 = vmor %vm652, %vm653
    %v655 = vsel %vm654, %v647, %v651
    %v656 = vand.u32 2147483647, %v646
    %vm657 = vcmp.eq.f32.partialorder %v656, 8.507059e+37
    %v658 = vand.u32 %v646, 2147483648
    %v659 = vor.u32 1.1754944e-38, %v658
    %v660 = vsel %vm657, %v659, %v655
    %v661 = vmul.f32 1.0, %v660
    %v662 = vsel %vm128, %v642, %v661
    %v664 = vrot.slane %v605, 6
    %v666 = vmul.f32 %v662, %v664
    %668 = vrot.lane.b32.xlu0 %v662, 64
    %v669 = vpop.permute.xlu0 %668
    %v671 = vmul.f32 %v662, %v669
    %673 = vrot.lane.b32.xlu0 %v671, 32
    %v674 = vpop.permute.xlu0 %673
    %v676 = vadd.f32 %v666, %v674
    %v677 = vtanh.pop %v676
    %679 = vrot.lane.b32.xlu0 %v677, 64
    %v680 = vpop.permute.xlu0 %679
    %v682 = vmul.f32 %v662, %v680
    %684 = vrot.lane.b32.xlu0 %v262, 64
    %v685 = vpop.permute.xlu0 %684
    %687 = vrot.lane.b32.xlu0 %v333, 96
    %v688 = vpop.permute.xlu0 %687
    %692 = vrot.lane.b32.xlu0 %v542, 64
    %v693 = vpop.permute.xlu0 %692
    %695 = vrot.lane.b32.xlu0 %v613, 96
    %v696 = vpop.permute.xlu0 %695
    %v699 = vrot.slane %v682, 6
    %v701 = vsel %vm92, %v193, %v685
    %vm702 = vcmask 523264
    %v703 = vsel %vm702, %v701, %v688
    %vm704 = vcmask 785408
    %v705 = vsel %vm704, %v703, %v404
    %v706 = vsel %vm92, %v473, %v693
    %v707 = vsel %vm702, %v706, %v696
    %v708 = vsel %vm704, %v707, %v699
    %v709 = vld [vmem:[%s5] sm:$0xff]
    %v710 = vld [vmem:[%s5 + $0x8] sm:$0xff]
    %v711 = vld [vmem:[%s5 + $0x10] sm:$0xff]
    %v712 = vld [vmem:[%s5 + $0x18] sm:$0xff]
    %v713 = vld [vmem:[%s5 + $0x20] sm:$0xff]
    %v714 = vld [vmem:[%s5 + $0x28] sm:$0xff]
    %v715 = vld [vmem:[%s5 + $0x30] sm:$0xff]
    %v716 = vld [vmem:[%s5 + $0x38] sm:$0xff]
    %v717 = vld [vmem:[%s5 + $0x40] sm:$0xff]
    %v718 = vld [vmem:[%s5 + $0x48] sm:$0xff]
    %v719 = vld [vmem:[%s5 + $0x50] sm:$0xff]
    %v720 = vld [vmem:[%s5 + $0x58] sm:$0xff]
    %v721 = vld [vmem:[%s5 + $0x60] sm:$0xff]
    %v722 = vld [vmem:[%s5 + $0x68] sm:$0xff]
    %v723 = vld [vmem:[%s5 + $0x70] sm:$0xff]
    %v724 = vld [vmem:[%s5 + $0x78] sm:$0xff]
    %v725 = vld [vmem:[%s5 + $0x80] sm:$0xff]
    %v726 = vld [vmem:[%s5 + $0x88] sm:$0xff]
    %v727 = vld [vmem:[%s5 + $0x90] sm:$0xff]
    %v728 = vld [vmem:[%s5 + $0x98] sm:$0xff]
    %v729 = vld [vmem:[%s5 + $0xa0] sm:$0xff]
    %v730 = vld [vmem:[%s5 + $0xa8] sm:$0xff]
    %v731 = vld [vmem:[%s5 + $0xb0] sm:$0xff]
    %v732 = vld [vmem:[%s5 + $0xb8] sm:$0xff]
    %v733 = vld [vmem:[%s5 + $0xc0] sm:$0xff]
    %v734 = vld [vmem:[%s5 + $0xc8] sm:$0xff]
    %v735 = vld [vmem:[%s5 + $0xd0] sm:$0xff]
    %v736 = vld [vmem:[%s5 + $0xd8] sm:$0xff]
    %v737 = vld [vmem:[%s5 + $0xe0] sm:$0xff]
    %v738 = vld [vmem:[%s5 + $0xe8] sm:$0xff]
    %v739 = vld [vmem:[%s5 + $0xf0] sm:$0xff]
    %v740 = vld [vmem:[%s5 + $0xf8] sm:$0xff]
    %v741 = vld [vmem:[%s6] sm:$0x1]
    %v743 = vperm.slane %v741, 0
    %745 = vmatpush.msra.mxu0 %v724
    %746 = vmatpush.msra.mxu0 %v723
    %747 = vmatpush.msra.mxu0 %v722
    %748 = vmatpush.msra.mxu0 %v721
    %749 = vmatpush.msra.mxu0 %v720
    %750 = vmatpush.msra.mxu0 %v719
    %751 = vmatpush.msra.mxu0 %v718
    %752 = vmatpush.msra.mxu0 %v717
    %753 = vmatpush.msra.mxu0 %v716
    %754 = vmatpush.msra.mxu0 %v715
    %755 = vmatpush.msra.mxu0 %v714
    %756 = vmatpush.msra.mxu0 %v713
    %757 = vmatpush.msra.mxu0 %v712
    %758 = vmatpush.msra.mxu0 %v711
    %759 = vmatpush.msra.mxu0 %v710
    %760 = vmatpush.msra.mxu0 %v709
    %761 = vmatmul.f32.gmra.mxu0 %v705
    %v762 = vpop.f32.mrf.mxu0
    %v763 = vadd.f32 %v743, %v762
    %764 = vdwg.mxu0
    %765 = vmatpush.msra.mxu0 %v740
    %766 = vmatpush.msra.mxu0 %v739
    %767 = vmatpush.msra.mxu0 %v738
    %768 = vmatpush.msra.mxu0 %v737
    %769 = vmatpush.msra.mxu0 %v736
    %770 = vmatpush.msra.mxu0 %v735
    %771 = vmatpush.msra.mxu0 %v734
    %772 = vmatpush.msra.mxu0 %v733
    %773 = vmatpush.msra.mxu0 %v732
    %774 = vmatpush.msra.mxu0 %v731
    %775 = vmatpush.msra.mxu0 %v730
    %776 = vmatpush.msra.mxu0 %v729
    %777 = vmatpush.msra.mxu0 %v728
    %778 = vmatpush.msra.mxu0 %v727
    %779 = vmatpush.msra.mxu0 %v726
    %780 = vmatpush.msra.mxu0 %v725
    %781 = vmatmul.f32.gmra.mxu0 %v708
    %v782 = vpop.f32.mrf.mxu0
    %v783 = vadd.f32 %v763, %v782
    %784 = vdwg.mxu0
    %vm785 = vcmask 58368
    %v786 = vsel %vm785, %v783, -inf
    %787 = vmax.xlane.f32.xlu0 %v786
    %v788 = vpop.xlane.xlu0 %787
    %v789 = vsub.f32 %v783, %v788
    %v790 = vmul.f32 %v789, 1.442695
    %v791 = vpow.pop %v790
    %v792 = vsel %vm785, %v791, 0.0
    %793 = vadd.xlane.f32.xlu0 %v792
    %v794 = vpop.xlane.xlu0 %793
    %v795 = vlog2.pop %v794
    %v796 = vmul.f32 %v795, 0.6931472
    %v797 = vsub.f32 %v789, %v796
    %798 = vst.msk [vmem:[#allocation2] sm:$0x3] %vm785, %v797
    // Predicated region
    $region30: #{tpu_custom_call.1} parent=1 // pred_check
      _
    $region31: #{tpu_custom_call.1} parent=1 // pred_check_branch
      %800 = sbr.rel (0) target = $region33
    $region32: #{tpu_custom_call.1} parent=1 // pred_region
      %802 = vsyncadd [#allocation3], 0
      %s804 = sshll.u32 [#allocation2], 4
      %s805 = int_to_ptr.vmem [resolvable:$true] %s804
      %s806 = sshll.u32 %s7, 4
      %s807 = int_to_ptr.hbm [resolvable:$true] %s806
      %809 = dma.vmem_to_hbm [thread:$0]  %s805, 32, %s807, [#allocation3]
    $region33: #{tpu_custom_call.1} parent=1 // pred_fallthru
      _
    // Predicated region
    $region34: #{tpu_custom_call.1} parent=1 // pred_check
      _
    $region35: #{tpu_custom_call.1} parent=1 // pred_check_branch
      %811 = sbr.rel (0) target = $region37
    $region36: #{tpu_custom_call.1} parent=1 // pred_region
      %813 = dma.done [#allocation3], 32
    $region37: #{tpu_custom_call.1} parent=1 // pred_fallthru
      _
    %814 = vsyncpa [#allocation3], 1

</llo_original>
